<compile_context>
chip_gen: v7x
topology: tpu7x:2x2x1
jax: 0.10.0
libtpu: 0.0.40
codegen_flags: <defaults>
</compile_context>

<pallas_src>
import jax
import jax.numpy as jnp
from jax.experimental import pallas as pl
from jax.experimental.pallas import tpu as pltpu

# Problem sizes (small, consistent with the (b, c, h, w) forward contract).
B, C, H, W = 2, 4, 16, 16
D = C * H * W            # 1024 flattened feature dim (lane axis)
Z = 32                   # latent dim
ENC_N = 128              # fused (mu | logvar | pad) encoder output width (lane-dense)
LOSS_LANES = 128         # lane extent of the per-tile loss-partials block
LOSS_SUBLANES = 8        # sublane extent (8 keeps the block (8,128)-aligned)


def _make_vae_kernel(tile_b: int, b_actual: int, b_pad: int):
    """Builds the per-batch-tile kernel; static batch facts are closed over."""
    masked = b_pad != b_actual   # only emit the row mask when padding exists

    def kernel(x_ref, eps_ref, wenc_ref, benc_ref, wdec_ref, bdec_ref,
               recon_ref, part_ref):
        x = x_ref[...]                                              # (TB, D) f32

        # Fused encoder: single MXU pass over the lane-dense (D, 128) bf16
        # weight whose columns are [w_mu | w_logvar | zero-pad]; f32 accumulate.
        enc = jnp.dot(x.astype(jnp.bfloat16), wenc_ref[...],
                      preferred_element_type=jnp.float32) + benc_ref[...]
        mu = enc[:, :Z]                                             # (TB, Z)
        logvar = enc[:, Z:2 * Z]                                    # (TB, Z)

        # Reparameterization: z = mu + std * eps (elementwise math stays f32).
        std = jnp.exp(0.5 * logvar)
        z = mu + std * eps_ref[...]                                 # (TB, Z)

        # Decoder (MXU, bf16 operands / f32 accumulate).
        recon = jnp.dot(z.astype(jnp.bfloat16), wdec_ref[...],
                        preferred_element_type=jnp.float32) + bdec_ref[...]
        # bf16 writeback halves the dominant HBM write stream; loss uses the
        # f32 recon below so numerics match the f32-accumulate reference.
        recon_ref[...] = recon.astype(recon_ref.dtype)

        # Per-tile loss partial sums (batch-mean and beta applied in wrapper).
        diff = recon - x
        sq = diff * diff                                            # (TB, D)
        var = std * std                                             # == exp(logvar)
        kl_terms = 1.0 + logvar - mu * mu - var                     # (TB, Z)

        if masked:
            # Zero out contributions from zero-padded batch rows.
            i = pl.program_id(0)
            row = jax.lax.broadcasted_iota(jnp.int32, (tile_b, 1), 0) + i * tile_b
            valid = (row < b_actual).astype(jnp.float32)            # (TB, 1)
            sq = sq * valid
            kl_terms = kl_terms * valid

        recon_part = jnp.sum(sq)
        kl_part = -0.5 * jnp.sum(kl_terms)

        # Pack both partials into one (8, 128) lane/sublane-aligned block:
        # (sublane 0, lane 0) = recon partial, (sublane 0, lane 1) = kl partial.
        sub = jax.lax.broadcasted_iota(jnp.int32, (LOSS_SUBLANES, LOSS_LANES), 0)
        lane = jax.lax.broadcasted_iota(jnp.int32, (LOSS_SUBLANES, LOSS_LANES), 1)
        part_ref[...] = jnp.where((sub == 0) & (lane == 0), recon_part,
                                  jnp.where((sub == 0) & (lane == 1), kl_part,
                                            0.0))

    return kernel


def init_params(key):
    """Deterministic synthetic parameters.

    Weights are stored bf16 (MXU-native, halves weight DMA); biases stay f32
    since they are added after the f32 accumulation.
    """
    k1, k2, k3, k4, k5 = jax.random.split(key, 5)
    scale = 0.02
    w_mu = scale * jax.random.normal(k1, (D, Z), jnp.float32)
    w_logvar = scale * jax.random.normal(k2, (D, Z), jnp.float32)
    # Fused, lane-padded encoder weight: columns [w_mu | w_logvar | 0] -> (D, 128).
    w_enc = jnp.zeros((D, ENC_N), jnp.float32)
    w_enc = w_enc.at[:, :Z].set(w_mu).at[:, Z:2 * Z].set(w_logvar)
    b_enc = jnp.zeros((1, ENC_N), jnp.float32)
    b_enc = b_enc.at[:, :2 * Z].set(
        0.01 * jax.random.normal(k4, (1, 2 * Z), jnp.float32))
    w_dec = scale * jax.random.normal(k3, (Z, D), jnp.float32)
    b_dec = 0.01 * jax.random.normal(k5, (1, D), jnp.float32)
    return {
        "w_enc": w_enc.astype(jnp.bfloat16),
        "b_enc": b_enc,
        "w_dec": w_dec.astype(jnp.bfloat16),
        "b_dec": b_dec,
    }


def _round_up(x: int, m: int) -> int:
    return (x + m - 1) // m * m


def _pick_tile_b(b: int) -> int:
    """Batch-tile heuristic.

    * Tiny batches: one full-extent tile (the demo's B=2).
    * Otherwise aim for >=2 tiles so v7x's two TensorCores both get work
      under dimension_semantics=("parallel",), while keeping tiles as large
      as possible (per-grid-step overhead ~0.35 us dominates small tiles).
    * Cap at 512 rows: double-buffered f32 x + bf16 recon at 512 rows is
      ~6 MiB, comfortably under v5e's scoped-VMEM limit.
    """
    if b <= 16:
        return b
    half = _round_up(pl.cdiv(b, 2), 8)
    return max(8, min(512, half))


def vae_forward(x_nchw, params, eps, beta: float = 1.0):
    """Equivalent of BaseVAE.forward / inference: returns (recon, loss_dict)."""
    b = x_nchw.shape[0]
    x2d = x_nchw.reshape(b, -1).astype(jnp.float32)                 # (B, D)
    assert x2d.shape[1] == D

    tile_b = _pick_tile_b(b)
    b_pad = _round_up(b, tile_b)
    n_tiles = b_pad // tile_b
    if b_pad != b:
        x2d = jnp.pad(x2d, ((0, b_pad - b), (0, 0)))
        eps = jnp.pad(eps, ((0, b_pad - b), (0, 0)))

    cost = pl.CostEstimate(
        flops=2 * b_pad * D * ENC_N + 2 * b_pad * Z * D + 8 * b_pad * Z
              + 3 * b_pad * D,
        transcendentals=b_pad * Z,
        bytes_accessed=4 * b_pad * D            # x read (f32)
                       + 2 * b_pad * D          # recon write (bf16)
                       + 4 * b_pad * Z          # eps read
                       + 2 * D * ENC_N + 4 * ENC_N   # encoder weights/bias
                       + 2 * Z * D + 4 * D           # decoder weights/bias
                       + 4 * n_tiles * LOSS_SUBLANES * LOSS_LANES,
    )

    kernel = _make_vae_kernel(tile_b, b, b_pad)

    grid_spec = pltpu.PrefetchScalarGridSpec(
        num_scalar_prefetch=0,
        grid=(n_tiles,),
        in_specs=[
            pl.BlockSpec((tile_b, D), lambda i: (i, 0)),        # x tile
            pl.BlockSpec((tile_b, Z), lambda i: (i, 0)),        # eps tile
            pl.BlockSpec((D, ENC_N), lambda i: (0, 0)),         # fused enc weight (resident)
            pl.BlockSpec((1, ENC_N), lambda i: (0, 0)),         # enc bias (resident)
            pl.BlockSpec((Z, D), lambda i: (0, 0)),             # dec weight (resident)
            pl.BlockSpec((1, D), lambda i: (0, 0)),             # dec bias (resident)
        ],
        out_specs=(
            pl.BlockSpec((tile_b, D), lambda i: (i, 0)),        # recon tile (bf16)
            pl.BlockSpec((LOSS_SUBLANES, LOSS_LANES), lambda i: (i, 0)),  # loss partials
        ),
    )

    recon2d, partials = pl.pallas_call(
        kernel,
        out_shape=(
            jax.ShapeDtypeStruct((b_pad, D), jnp.bfloat16),     # reconstruction
            jax.ShapeDtypeStruct((n_tiles * LOSS_SUBLANES, LOSS_LANES),
                                 jnp.float32),
        ),
        grid_spec=grid_spec,
        compiler_params=pltpu.CompilerParams(
            dimension_semantics=("parallel",),
            vmem_limit_bytes=32 << 20),   # headroom; safe on v5e/v6e/v7x
        cost_estimate=cost,
    )(x2d, eps, params["w_enc"], params["b_enc"],
      params["w_dec"], params["b_dec"])

    # Finalize the ELBO scalars from the per-tile partial sums (tiny XLA ops);
    # beta / batch size stay runtime values of the epilogue, not of the kernel.
    sums = jnp.sum(partials, axis=0)                              # (128,)
    recon_loss = sums[0] / b
    kl_loss = sums[1] / b
    loss = recon_loss + beta * kl_loss

    recon = recon2d[:b].astype(x_nchw.dtype).reshape(x_nchw.shape)
    return recon, {"loss": loss, "recon_loss": recon_loss, "kl_loss": kl_loss}


def _reference_forward(x_nchw, params, eps, beta=1.0):
    """Plain-JAX reference (same bf16-weight model) for a sanity check."""
    b = x_nchw.shape[0]
    x = x_nchw.reshape(b, -1).astype(jnp.float32)
    enc = jnp.dot(x.astype(jnp.bfloat16), params["w_enc"],
                  preferred_element_type=jnp.float32) + params["b_enc"]
    mu, logvar = enc[:, :Z], enc[:, Z:2 * Z]
    std = jnp.exp(0.5 * logvar)
    z = mu + std * eps
    recon = jnp.dot(z.astype(jnp.bfloat16), params["w_dec"],
                    preferred_element_type=jnp.float32) + params["b_dec"]
    recon_loss = jnp.sum((recon - x) ** 2) / b
    kl = -0.5 * jnp.sum(1.0 + logvar - mu * mu - std * std) / b
    return recon.reshape(x_nchw.shape), {
        "loss": recon_loss + beta * kl,
        "recon_loss": recon_loss,
        "kl_loss": kl,
    }


if __name__ == "__main__":
    key = jax.random.PRNGKey(0)
    k_params, k_x, k_eps = jax.random.split(key, 3)

    params = init_params(k_params)
    x = jax.random.normal(k_x, (B, C, H, W), jnp.float32)
    eps = jax.random.normal(k_eps, (B, Z), jnp.float32)   # reparameterization noise
    # TODO(synk): BaseVAE.inference/sample are abstract in the reference; a
    # concrete Gaussian VAE with a linear encoder/decoder gives forward() a body.
    # eps stays an explicit input for deterministic checking; it could instead
    # be generated in-kernel (pltpu.prng_seed + pltpu.stateful_normal) to drop
    # one small DMA.

    recon, loss_dict = vae_forward(x, params, eps, beta=1.0)
    jax.block_until_ready((recon, loss_dict))

    # Numerical check against a plain-JAX reference (recon is bf16-rounded by
    # the kernel writeback, so the tolerance is bf16-level).
    ref_recon, ref_losses = _reference_forward(x, params, eps, beta=1.0)
    assert recon.shape == x.shape
    assert jnp.allclose(recon, ref_recon, rtol=2e-2, atol=2e-2)
    for name in ("loss", "recon_loss", "kl_loss"):
        assert jnp.allclose(loss_dict[name], ref_losses[name],
                            rtol=1e-2, atol=1e-2), name

    print("KERNEL_OK")
</pallas_src>

<mosaic_0001>
module attributes {stable_mosaic.version = 11 : i64} {
  func.func @kernel(%arg0: i32, %arg1: memref<2x1024xf32, #tpu.memory_space<vmem>>, %arg2: memref<2x32xf32, #tpu.memory_space<vmem>>, %arg3: memref<1024x128xbf16, #tpu.memory_space<vmem>>, %arg4: memref<1x128xf32, #tpu.memory_space<vmem>>, %arg5: memref<32x1024xbf16, #tpu.memory_space<vmem>>, %arg6: memref<1x1024xf32, #tpu.memory_space<vmem>>, %arg7: memref<2x1024xbf16, #tpu.memory_space<vmem>>, %arg8: memref<8x128xf32, #tpu.memory_space<vmem>>) attributes {dimension_semantics = [#tpu.dimension_semantics<parallel>], iteration_bounds = array<i64: 1>, scalar_prefetch = 0 : i64, scratch_operands = 0 : i64, tpu.core_type = #tpu.core_type<tc>, window_params = [{transform_indices = @transform_0, window_bounds = array<i64: 2, 1024>}, {transform_indices = @transform_1, window_bounds = array<i64: 2, 32>}, {pipeline_mode = #tpu.pipeline_mode<synchronous>, transform_indices = @transform_2, window_bounds = array<i64: 1024, 128>}, {pipeline_mode = #tpu.pipeline_mode<synchronous>, transform_indices = @transform_3, window_bounds = array<i64: 1, 128>}, {pipeline_mode = #tpu.pipeline_mode<synchronous>, transform_indices = @transform_4, window_bounds = array<i64: 32, 1024>}, {pipeline_mode = #tpu.pipeline_mode<synchronous>, transform_indices = @transform_5, window_bounds = array<i64: 1, 1024>}, {transform_indices = @transform_6, window_bounds = array<i64: 2, 1024>}, {transform_indices = @transform_7, window_bounds = array<i64: 8, 128>}]} {
    %c0 = arith.constant 0 : index
    %c0_0 = arith.constant 0 : index
    %0 = vector.load %arg1[%c0, %c0_0] : memref<2x1024xf32, #tpu.memory_space<vmem>>, vector<2x1024xf32>
    %1 = arith.truncf %0 : vector<2x1024xf32> to vector<2x1024xbf16>
    %c0_1 = arith.constant 0 : index
    %c0_2 = arith.constant 0 : index
    %2 = vector.load %arg3[%c0_1, %c0_2] : memref<1024x128xbf16, #tpu.memory_space<vmem>>, vector<1024x128xbf16>
    %cst = arith.constant dense<0.000000e+00> : vector<2x128xf32>
    %3 = tpu.matmul %1, %2, %cst {dimension_numbers = #tpu.dot_dimension_numbers<[1], [0], [0], [1], [0, 0, 1, 1], [], []>} : vector<2x1024xbf16>, vector<1024x128xbf16>, vector<2x128xf32> -> vector<2x128xf32>
    %c0_3 = arith.constant 0 : index
    %c0_4 = arith.constant 0 : index
    %4 = vector.load %arg4[%c0_3, %c0_4] : memref<1x128xf32, #tpu.memory_space<vmem>>, vector<1x128xf32>
    %5 = vector.broadcast %4 : vector<1x128xf32> to vector<2x128xf32>
    %6 = arith.addf %3, %5 : vector<2x128xf32>
    %7 = vector.extract_strided_slice %6 {offsets = [0, 0], sizes = [2, 32], strides = [1, 1]} : vector<2x128xf32> to vector<2x32xf32>
    %8 = vector.extract_strided_slice %6 {offsets = [0, 32], sizes = [2, 32], strides = [1, 1]} : vector<2x128xf32> to vector<2x32xf32>
    %cst_5 = arith.constant 5.000000e-01 : f32
    %9 = vector.broadcast %cst_5 : f32 to vector<2x32xf32>
    %10 = arith.mulf %9, %8 : vector<2x32xf32>
    %11 = math.exp %10 : vector<2x32xf32>
    %c0_6 = arith.constant 0 : index
    %c0_7 = arith.constant 0 : index
    %12 = vector.load %arg2[%c0_6, %c0_7] : memref<2x32xf32, #tpu.memory_space<vmem>>, vector<2x32xf32>
    %13 = arith.mulf %11, %12 : vector<2x32xf32>
    %14 = arith.addf %7, %13 : vector<2x32xf32>
    %15 = arith.truncf %14 : vector<2x32xf32> to vector<2x32xbf16>
    %c0_8 = arith.constant 0 : index
    %c0_9 = arith.constant 0 : index
    %16 = vector.load %arg5[%c0_8, %c0_9] : memref<32x1024xbf16, #tpu.memory_space<vmem>>, vector<32x1024xbf16>
    %cst_10 = arith.constant dense<0.000000e+00> : vector<2x1024xf32>
    %17 = tpu.matmul %15, %16, %cst_10 {dimension_numbers = #tpu.dot_dimension_numbers<[1], [0], [0], [1], [0, 0, 1, 1], [], []>} : vector<2x32xbf16>, vector<32x1024xbf16>, vector<2x1024xf32> -> vector<2x1024xf32>
    %c0_11 = arith.constant 0 : index
    %c0_12 = arith.constant 0 : index
    %18 = vector.load %arg6[%c0_11, %c0_12] : memref<1x1024xf32, #tpu.memory_space<vmem>>, vector<1x1024xf32>
    %19 = vector.broadcast %18 : vector<1x1024xf32> to vector<2x1024xf32>
    %20 = arith.addf %17, %19 : vector<2x1024xf32>
    %21 = arith.truncf %20 : vector<2x1024xf32> to vector<2x1024xbf16>
    %c0_13 = arith.constant 0 : index
    %c0_14 = arith.constant 0 : index
    %22 = vector.load %arg7[%c0_13, %c0_14] : memref<2x1024xbf16, #tpu.memory_space<vmem>>, vector<2x1024xbf16>
    tpu.vector_store %arg7[%c0_13, %c0_14], %21 {strides = array<i32>} : memref<2x1024xbf16, #tpu.memory_space<vmem>>, vector<2x1024xbf16>,
    %23 = arith.subf %20, %0 : vector<2x1024xf32>
    %24 = arith.mulf %23, %23 : vector<2x1024xf32>
    %25 = arith.mulf %11, %11 : vector<2x32xf32>
    %cst_15 = arith.constant 1.000000e+00 : f32
    %26 = vector.broadcast %cst_15 : f32 to vector<2x32xf32>
    %27 = arith.addf %26, %8 : vector<2x32xf32>
    %28 = arith.mulf %7, %7 : vector<2x32xf32>
    %29 = arith.subf %27, %28 : vector<2x32xf32>
    %30 = arith.subf %29, %25 : vector<2x32xf32>
    %31 = vector.shape_cast %24 : vector<2x1024xf32> to vector<1x2x1024xf32>
    %cst_16 = arith.constant dense<0.000000e+00> : vector<1xf32>
    %32 = vector.multi_reduction <add>, %31, %cst_16 [1, 2] : vector<1x2x1024xf32> to vector<1xf32>
    %33 = vector.shape_cast %32 : vector<1xf32> to vector<1x1x1xf32>
    %34 = vector.extract %33[0, 0, 0] : f32 from vector<1x1x1xf32>
    %35 = vector.shape_cast %30 : vector<2x32xf32> to vector<1x2x32xf32>
    %cst_17 = arith.constant dense<0.000000e+00> : vector<1xf32>
    %36 = vector.multi_reduction <add>, %35, %cst_17 [1, 2] : vector<1x2x32xf32> to vector<1xf32>
    %37 = vector.shape_cast %36 : vector<1xf32> to vector<1x1x1xf32>
    %38 = vector.extract %37[0, 0, 0] : f32 from vector<1x1x1xf32>
    %cst_18 = arith.constant -5.000000e-01 : f32
    %39 = arith.mulf %cst_18, %38 : f32
    %40 = tpu.iota {dimensions = array<i32: 0>} : vector<8x128xi32>
    %41 = tpu.iota {dimensions = array<i32: 1>} : vector<8x128xi32>
    %c0_i32 = arith.constant 0 : i32
    %42 = vector.broadcast %c0_i32 : i32 to vector<8x128xi32>
    %43 = arith.cmpi eq, %40, %42 : vector<8x128xi32>
    %c0_i32_19 = arith.constant 0 : i32
    %44 = vector.broadcast %c0_i32_19 : i32 to vector<8x128xi32>
    %45 = arith.cmpi eq, %41, %44 : vector<8x128xi32>
    %46 = arith.andi %43, %45 : vector<8x128xi1>
    %c0_i32_20 = arith.constant 0 : i32
    %47 = vector.broadcast %c0_i32_20 : i32 to vector<8x128xi32>
    %48 = arith.cmpi eq, %40, %47 : vector<8x128xi32>
    %c1_i32 = arith.constant 1 : i32
    %49 = vector.broadcast %c1_i32 : i32 to vector<8x128xi32>
    %50 = arith.cmpi eq, %41, %49 : vector<8x128xi32>
    %51 = arith.andi %48, %50 : vector<8x128xi1>
    %cst_21 = arith.constant 0.000000e+00 : f32
    %52 = vector.broadcast %39 : f32 to vector<8x128xf32>
    %53 = vector.broadcast %cst_21 : f32 to vector<8x128xf32>
    %54 = arith.select %51, %52, %53 : vector<8x128xi1>, vector<8x128xf32>
    %55 = vector.broadcast %34 : f32 to vector<8x128xf32>
    %56 = arith.select %46, %55, %54 : vector<8x128xi1>, vector<8x128xf32>
    %c0_22 = arith.constant 0 : index
    %c0_23 = arith.constant 0 : index
    %57 = vector.load %arg8[%c0_22, %c0_23] : memref<8x128xf32, #tpu.memory_space<vmem>>, vector<8x128xf32>
    tpu.vector_store %arg8[%c0_22, %c0_23], %56 {strides = array<i32>} : memref<8x128xf32, #tpu.memory_space<vmem>>, vector<8x128xf32>,
    return
  }
  func.func @transform_0(%arg0: i32) -> (i32, i32) {
    %c0_i32 = arith.constant 0 : i32
    %c0_i32_0 = arith.constant 0 : i32
    return %arg0, %c0_i32 : i32, i32
  }
  func.func @transform_1(%arg0: i32) -> (i32, i32) {
    %c0_i32 = arith.constant 0 : i32
    %c0_i32_0 = arith.constant 0 : i32
    return %arg0, %c0_i32 : i32, i32
  }
  func.func @transform_2(%arg0: i32) -> (i32, i32) {
    %c0_i32 = arith.constant 0 : i32
    %c0_i32_0 = arith.constant 0 : i32
    %c0_i32_1 = arith.constant 0 : i32
    return %c0_i32, %c0_i32_0 : i32, i32
  }
  func.func @transform_3(%arg0: i32) -> (i32, i32) {
    %c0_i32 = arith.constant 0 : i32
    %c0_i32_0 = arith.constant 0 : i32
    %c0_i32_1 = arith.constant 0 : i32
    return %c0_i32, %c0_i32_0 : i32, i32
  }
  func.func @transform_4(%arg0: i32) -> (i32, i32) {
    %c0_i32 = arith.constant 0 : i32
    %c0_i32_0 = arith.constant 0 : i32
    %c0_i32_1 = arith.constant 0 : i32
    return %c0_i32, %c0_i32_0 : i32, i32
  }
  func.func @transform_5(%arg0: i32) -> (i32, i32) {
    %c0_i32 = arith.constant 0 : i32
    %c0_i32_0 = arith.constant 0 : i32
    %c0_i32_1 = arith.constant 0 : i32
    return %c0_i32, %c0_i32_0 : i32, i32
  }
  func.func @transform_6(%arg0: i32) -> (i32, i32) {
    %c0_i32 = arith.constant 0 : i32
    %c0_i32_0 = arith.constant 0 : i32
    return %arg0, %c0_i32 : i32, i32
  }
  func.func @transform_7(%arg0: i32) -> (i32, i32) {
    %c0_i32 = arith.constant 0 : i32
    %c0_i32_0 = arith.constant 0 : i32
    return %arg0, %c0_i32 : i32, i32
  }
}

</mosaic_0001>

<llo_original>
// kernel: tpu_custom_call.1
$region0: #{tpu_custom_call.1}
  #allocation0 [shape = 'u32[]', space=smem, size = 0x4, offset = 0x4, fixed_abs, tag = 'smem constant byte address 0x4 - core index']
  #allocation1 [shape = 'u32[144,128]{1,0:T(1,128)}', space=vmem, size = 0x12000, scoped, tag = 'internal scratch']
  %s0 = inlined_call_operand.hbm [shape: f32[2,1024], index: 0, kind: input, shape index: {}]
  %s1 = inlined_call_operand.vmem [shape: f32[2,32], index: 1, kind: input, shape index: {}]
  %s2 = inlined_call_operand.hbm [shape: bf16[1024,128], index: 2, kind: input, shape index: {}]
  %s3 = inlined_call_operand.vmem [shape: f32[1,128], index: 3, kind: input, shape index: {}]
  %s4 = inlined_call_operand.hbm [shape: bf16[32,1024], index: 4, kind: input, shape index: {}]
  %s5 = inlined_call_operand.vmem [shape: f32[1,1024], index: 5, kind: input, shape index: {}]
  %s6 = inlined_call_operand.hbm [shape: bf16[2,1024], index: 6, kind: output, shape index: {0}]
  %s7 = inlined_call_operand.hbm [shape: f32[8,128], index: 7, kind: output, shape index: {1}]
  %8 = xla_tuple %s6, %s7
  %s9 = sld [smem:[#allocation0]]
  $region54: #{tpu_custom_call.1} parent=0
    _
  %s11 = ssub.s32 1, %s9
  %s12 = scalar_select 0, %s11, %s9
  $region1: #{tpu_custom_call.1} parent=0
    #allocation2 [shape = 'u8[8192]{0}', space=vmem, size = 0x2000, scoped, tag = 'input window, operand 0, single buffered']
    #allocation3 [shape = 's32[1]{0}', space=sflag, size = 0x4, scoped, tag = 'scoped memory for tpu_custom_call.1']
    #allocation4 [shape = 's32[1]{0}', space=sflag, size = 0x4, scoped, tag = 'scoped memory for tpu_custom_call.1']
    #allocation5 [shape = 'u8[262144]{0}', space=vmem, size = 0x40000, scoped, tag = 'input window, operand 2, single buffered']
    #allocation6 [shape = 's32[1]{0}', space=sflag, size = 0x4, scoped, tag = 'scoped memory for tpu_custom_call.1']
    #allocation7 [shape = 'u8[65536]{0}', space=vmem, size = 0x10000, scoped, tag = 'input window, operand 4, single buffered']
    #allocation8 [shape = 'u8[4096]{0}', space=vmem, size = 0x1000, scoped, tag = 'output window, operand 0, single buffered']
    #allocation9 [shape = 'u8[4096]{0}', space=vmem, size = 0x1000, scoped, tag = 'output window, operand 1, single buffered']
    #allocation10 [shape = 's32[1]{0}', space=sflag, size = 0x4, scoped, tag = 'scoped memory for tpu_custom_call.1']
    %13 = vsyncpa [#allocation3], 0
    %14 = vsyncpa [#allocation6], 0
    %15 = vsyncpa [#allocation4], 0
    %16 = vsyncpa [#allocation10], 0
    // Predicated region
    $region2: #{tpu_custom_call.1} parent=1 // pred_check
      _
    $region3: #{tpu_custom_call.1} parent=1 // pred_check_branch
      %18 = sbr.rel (0) target = $region5
    $region4: #{tpu_custom_call.1} parent=1 // pred_region
      %s20 = ssub.s32 256, 256
      %21 = vsyncadd [#allocation3], %s20
      %s23 = sshll.u32 [#allocation2], 4
      %s24 = int_to_ptr.vmem [resolvable:$true] %s23
      %26 = dma.hbm_to_vmem [thread:$0]  %s0, 256, %s24, [#allocation3]
    $region5: #{tpu_custom_call.1} parent=1 // pred_fallthru
      _
    // Predicated region
    $region6: #{tpu_custom_call.1} parent=1 // pred_check
      _
    $region7: #{tpu_custom_call.1} parent=1 // pred_check_branch
      %28 = sbr.rel (0) target = $region9
    $region8: #{tpu_custom_call.1} parent=1 // pred_region
      _
    $region9: #{tpu_custom_call.1} parent=1 // pred_fallthru
      _
    // Predicated region
    $region10: #{tpu_custom_call.1} parent=1 // pred_check
      _
    $region11: #{tpu_custom_call.1} parent=1 // pred_check_branch
      %30 = sbr.rel (0) target = $region13
    $region12: #{tpu_custom_call.1} parent=1 // pred_region
      %s32 = ssub.s32 8192, 8192
      %33 = vsyncadd [#allocation6], %s32
      %s34 = sshll.u32 [#allocation5], 4
      %s35 = int_to_ptr.vmem [resolvable:$true] %s34
      %40 = dma.hbm_to_vmem [thread:$0]  %s2, 8192, %s35, [#allocation6], 64, 64, 4
    $region13: #{tpu_custom_call.1} parent=1 // pred_fallthru
      _
    // Predicated region
    $region14: #{tpu_custom_call.1} parent=1 // pred_check
      _
    $region15: #{tpu_custom_call.1} parent=1 // pred_check_branch
      %42 = sbr.rel (0) target = $region17
    $region16: #{tpu_custom_call.1} parent=1 // pred_region
      _
    $region17: #{tpu_custom_call.1} parent=1 // pred_fallthru
      _
    // Predicated region
    $region18: #{tpu_custom_call.1} parent=1 // pred_check
      _
    $region19: #{tpu_custom_call.1} parent=1 // pred_check_branch
      %44 = sbr.rel (0) target = $region21
    $region20: #{tpu_custom_call.1} parent=1 // pred_region
      %s46 = ssub.s32 2048, 2048
      %47 = vsyncadd [#allocation6], %s46
      %s48 = sshll.u32 [#allocation7], 4
      %s49 = int_to_ptr.vmem [resolvable:$true] %s48
      %54 = dma.hbm_to_vmem [thread:$0]  %s4, 2048, %s49, [#allocation6], 512, 512, 32
    $region21: #{tpu_custom_call.1} parent=1 // pred_fallthru
      _
    // Predicated region
    $region22: #{tpu_custom_call.1} parent=1 // pred_check
      _
    $region23: #{tpu_custom_call.1} parent=1 // pred_check_branch
      %56 = sbr.rel (0) target = $region25
    $region24: #{tpu_custom_call.1} parent=1 // pred_region
      _
    $region25: #{tpu_custom_call.1} parent=1 // pred_fallthru
      _
    // Predicated region
    $region26: #{tpu_custom_call.1} parent=1 // pred_check
      _
    $region27: #{tpu_custom_call.1} parent=1 // pred_check_branch
      %58 = sbr.rel (0) target = $region29
    $region28: #{tpu_custom_call.1} parent=1 // pred_region
      %59 = dma.done [#allocation3], 256
    $region29: #{tpu_custom_call.1} parent=1 // pred_fallthru
      _
    // Predicated region
    $region30: #{tpu_custom_call.1} parent=1 // pred_check
      _
    $region31: #{tpu_custom_call.1} parent=1 // pred_check_branch
      %61 = sbr.rel (0) target = $region33
    $region32: #{tpu_custom_call.1} parent=1 // pred_region
      %62 = dma.done [#allocation6], 8192
    $region33: #{tpu_custom_call.1} parent=1 // pred_fallthru
      _
    // Predicated region
    $region34: #{tpu_custom_call.1} parent=1 // pred_check
      _
    $region35: #{tpu_custom_call.1} parent=1 // pred_check_branch
      %64 = sbr.rel (0) target = $region37
    $region36: #{tpu_custom_call.1} parent=1 // pred_region
      %65 = dma.done [#allocation6], 2048
    $region37: #{tpu_custom_call.1} parent=1 // pred_fallthru
      _
    %v67 = vld [vmem:[#allocation2] sm:$0xff]
    %v68 = vld [vmem:[#allocation2 + $0x8] sm:$0xff]
    %v71 = vcombine.high %v67, %v67
    %v73 = vunpack.c.l.s4 1983009808
    %v74 = vunpack.c.0.s8 %v73
    %v75 = vlaneseq
    %v76 = vshrl.u32 %v75, 7
    %v77 = vsub.s32 %v74, %v76
    %v78 = vrot.slane %v67, %v77
    %v80 = vunpack.c.l.s4 1983009808
    %v81 = vunpack.c.0.s8 %v80
    %v82 = vlaneseq
    %v83 = vshrl.u32 %v82, 7
    %v84 = vsub.s32 %v81, %v83
    %v85 = vrot.slane %v71, %v84
    %v86 = vcombine.high %v78, %v78
    %v87 = vcombine.high %v85, %v85
    %v88 = vcombine.high %v68, %v68
    %v90 = vunpack.c.l.s4 1983009808
    %v91 = vunpack.c.0.s8 %v90
    %v92 = vlaneseq
    %v93 = vshrl.u32 %v92, 7
    %v94 = vsub.s32 %v91, %v93
    %v95 = vrot.slane %v68, %v94
    %v97 = vunpack.c.l.s4 1983009808
    %v98 = vunpack.c.0.s8 %v97
    %v99 = vlaneseq
    %v100 = vshrl.u32 %v99, 7
    %v101 = vsub.s32 %v98, %v100
    %v102 = vrot.slane %v88, %v101
    %v103 = vcombine.high %v95, %v95
    %v104 = vcombine.high %v102, %v102
    %v113 = vpack.c.bf16 %v78, %v78
    %v114 = vpack.c.bf16 %v86, %v86
    %v115 = vpack.c.bf16 %v85, %v85
    %v116 = vpack.c.bf16 %v87, %v87
    %v117 = vpack.c.bf16 %v95, %v95
    %v118 = vpack.c.bf16 %v103, %v103
    %v119 = vpack.c.bf16 %v102, %v102
    %v120 = vpack.c.bf16 %v104, %v104
    %v121 = vld [vmem:[#allocation5] sm:$0xf]
    %v122 = vld [vmem:[#allocation5 + $0x4] sm:$0xf]
    %v123 = vld [vmem:[#allocation5 + $0x8] sm:$0xf]
    %v124 = vld [vmem:[#allocation5 + $0xc] sm:$0xf]
    %v125 = vld [vmem:[#allocation5 + $0x10] sm:$0xf]
    %v126 = vld [vmem:[#allocation5 + $0x14] sm:$0xf]
    %v127 = vld [vmem:[#allocation5 + $0x18] sm:$0xf]
    %v128 = vld [vmem:[#allocation5 + $0x1c] sm:$0xf]
    %v129 = vld [vmem:[#allocation5 + $0x20] sm:$0xf]
    %v130 = vld [vmem:[#allocation5 + $0x24] sm:$0xf]
    %v131 = vld [vmem:[#allocation5 + $0x28] sm:$0xf]
    %v132 = vld [vmem:[#allocation5 + $0x2c] sm:$0xf]
    %v133 = vld [vmem:[#allocation5 + $0x30] sm:$0xf]
    %v134 = vld [vmem:[#allocation5 + $0x34] sm:$0xf]
    %v135 = vld [vmem:[#allocation5 + $0x38] sm:$0xf]
    %v136 = vld [vmem:[#allocation5 + $0x3c] sm:$0xf]
    %v137 = vld [vmem:[#allocation5 + $0x40] sm:$0xf]
    %v138 = vld [vmem:[#allocation5 + $0x44] sm:$0xf]
    %v139 = vld [vmem:[#allocation5 + $0x48] sm:$0xf]
    %v140 = vld [vmem:[#allocation5 + $0x4c] sm:$0xf]
    %v141 = vld [vmem:[#allocation5 + $0x50] sm:$0xf]
    %v142 = vld [vmem:[#allocation5 + $0x54] sm:$0xf]
    %v143 = vld [vmem:[#allocation5 + $0x58] sm:$0xf]
    %v144 = vld [vmem:[#allocation5 + $0x5c] sm:$0xf]
    %v145 = vld [vmem:[#allocation5 + $0x60] sm:$0xf]
    %v146 = vld [vmem:[#allocation5 + $0x64] sm:$0xf]
    %v147 = vld [vmem:[#allocation5 + $0x68] sm:$0xf]
    %v148 = vld [vmem:[#allocation5 + $0x6c] sm:$0xf]
    %v149 = vld [vmem:[#allocation5 + $0x70] sm:$0xf]
    %v150 = vld [vmem:[#allocation5 + $0x74] sm:$0xf]
    %v151 = vld [vmem:[#allocation5 + $0x78] sm:$0xf]
    %v152 = vld [vmem:[#allocation5 + $0x7c] sm:$0xf]
    %v153 = vld [vmem:[#allocation5 + $0x80] sm:$0xf]
    %v154 = vld [vmem:[#allocation5 + $0x84] sm:$0xf]
    %v155 = vld [vmem:[#allocation5 + $0x88] sm:$0xf]
    %v156 = vld [vmem:[#allocation5 + $0x8c] sm:$0xf]
    %v157 = vld [vmem:[#allocation5 + $0x90] sm:$0xf]
    %v158 = vld [vmem:[#allocation5 + $0x94] sm:$0xf]
    %v159 = vld [vmem:[#allocation5 + $0x98] sm:$0xf]
    %v160 = vld [vmem:[#allocation5 + $0x9c] sm:$0xf]
    %v161 = vld [vmem:[#allocation5 + $0xa0] sm:$0xf]
    %v162 = vld [vmem:[#allocation5 + $0xa4] sm:$0xf]
    %v163 = vld [vmem:[#allocation5 + $0xa8] sm:$0xf]
    %v164 = vld [vmem:[#allocation5 + $0xac] sm:$0xf]
    %v165 = vld [vmem:[#allocation5 + $0xb0] sm:$0xf]
    %v166 = vld [vmem:[#allocation5 + $0xb4] sm:$0xf]
    %v167 = vld [vmem:[#allocation5 + $0xb8] sm:$0xf]
    %v168 = vld [vmem:[#allocation5 + $0xbc] sm:$0xf]
    %v169 = vld [vmem:[#allocation5 + $0xc0] sm:$0xf]
    %v170 = vld [vmem:[#allocation5 + $0xc4] sm:$0xf]
    %v171 = vld [vmem:[#allocation5 + $0xc8] sm:$0xf]
    %v172 = vld [vmem:[#allocation5 + $0xcc] sm:$0xf]
    %v173 = vld [vmem:[#allocation5 + $0xd0] sm:$0xf]
    %v174 = vld [vmem:[#allocation5 + $0xd4] sm:$0xf]
    %v175 = vld [vmem:[#allocation5 + $0xd8] sm:$0xf]
    %v176 = vld [vmem:[#allocation5 + $0xdc] sm:$0xf]
    %v177 = vld [vmem:[#allocation5 + $0xe0] sm:$0xf]
    %v178 = vld [vmem:[#allocation5 + $0xe4] sm:$0xf]
    %v179 = vld [vmem:[#allocation5 + $0xe8] sm:$0xf]
    %v180 = vld [vmem:[#allocation5 + $0xec] sm:$0xf]
    %v181 = vld [vmem:[#allocation5 + $0xf0] sm:$0xf]
    %v182 = vld [vmem:[#allocation5 + $0xf4] sm:$0xf]
    %v183 = vld [vmem:[#allocation5 + $0xf8] sm:$0xf]
    %v184 = vld [vmem:[#allocation5 + $0xfc] sm:$0xf]
    %v185 = vld [vmem:[#allocation5 + $0x100] sm:$0xf]
    %v186 = vld [vmem:[#allocation5 + $0x104] sm:$0xf]
    %v187 = vld [vmem:[#allocation5 + $0x108] sm:$0xf]
    %v188 = vld [vmem:[#allocation5 + $0x10c] sm:$0xf]
    %v189 = vld [vmem:[#allocation5 + $0x110] sm:$0xf]
    %v190 = vld [vmem:[#allocation5 + $0x114] sm:$0xf]
    %v191 = vld [vmem:[#allocation5 + $0x118] sm:$0xf]
    %v192 = vld [vmem:[#allocation5 + $0x11c] sm:$0xf]
    %v193 = vld [vmem:[#allocation5 + $0x120] sm:$0xf]
    %v194 = vld [vmem:[#allocation5 + $0x124] sm:$0xf]
    %v195 = vld [vmem:[#allocation5 + $0x128] sm:$0xf]
    %v196 = vld [vmem:[#allocation5 + $0x12c] sm:$0xf]
    %v197 = vld [vmem:[#allocation5 + $0x130] sm:$0xf]
    %v198 = vld [vmem:[#allocation5 + $0x134] sm:$0xf]
    %v199 = vld [vmem:[#allocation5 + $0x138] sm:$0xf]
    %v200 = vld [vmem:[#allocation5 + $0x13c] sm:$0xf]
    %v201 = vld [vmem:[#allocation5 + $0x140] sm:$0xf]
    %v202 = vld [vmem:[#allocation5 + $0x144] sm:$0xf]
    %v203 = vld [vmem:[#allocation5 + $0x148] sm:$0xf]
    %v204 = vld [vmem:[#allocation5 + $0x14c] sm:$0xf]
    %v205 = vld [vmem:[#allocation5 + $0x150] sm:$0xf]
    %v206 = vld [vmem:[#allocation5 + $0x154] sm:$0xf]
    %v207 = vld [vmem:[#allocation5 + $0x158] sm:$0xf]
    %v208 = vld [vmem:[#allocation5 + $0x15c] sm:$0xf]
    %v209 = vld [vmem:[#allocation5 + $0x160] sm:$0xf]
    %v210 = vld [vmem:[#allocation5 + $0x164] sm:$0xf]
    %v211 = vld [vmem:[#allocation5 + $0x168] sm:$0xf]
    %v212 = vld [vmem:[#allocation5 + $0x16c] sm:$0xf]
    %v213 = vld [vmem:[#allocation5 + $0x170] sm:$0xf]
    %v214 = vld [vmem:[#allocation5 + $0x174] sm:$0xf]
    %v215 = vld [vmem:[#allocation5 + $0x178] sm:$0xf]
    %v216 = vld [vmem:[#allocation5 + $0x17c] sm:$0xf]
    %v217 = vld [vmem:[#allocation5 + $0x180] sm:$0xf]
    %v218 = vld [vmem:[#allocation5 + $0x184] sm:$0xf]
    %v219 = vld [vmem:[#allocation5 + $0x188] sm:$0xf]
    %v220 = vld [vmem:[#allocation5 + $0x18c] sm:$0xf]
    %v221 = vld [vmem:[#allocation5 + $0x190] sm:$0xf]
    %v222 = vld [vmem:[#allocation5 + $0x194] sm:$0xf]
    %v223 = vld [vmem:[#allocation5 + $0x198] sm:$0xf]
    %v224 = vld [vmem:[#allocation5 + $0x19c] sm:$0xf]
    %v225 = vld [vmem:[#allocation5 + $0x1a0] sm:$0xf]
    %v226 = vld [vmem:[#allocation5 + $0x1a4] sm:$0xf]
    %v227 = vld [vmem:[#allocation5 + $0x1a8] sm:$0xf]
    %v228 = vld [vmem:[#allocation5 + $0x1ac] sm:$0xf]
    %v229 = vld [vmem:[#allocation5 + $0x1b0] sm:$0xf]
    %v230 = vld [vmem:[#allocation5 + $0x1b4] sm:$0xf]
    %v231 = vld [vmem:[#allocation5 + $0x1b8] sm:$0xf]
    %v232 = vld [vmem:[#allocation5 + $0x1bc] sm:$0xf]
    %v233 = vld [vmem:[#allocation5 + $0x1c0] sm:$0xf]
    %v234 = vld [vmem:[#allocation5 + $0x1c4] sm:$0xf]
    %v235 = vld [vmem:[#allocation5 + $0x1c8] sm:$0xf]
    %v236 = vld [vmem:[#allocation5 + $0x1cc] sm:$0xf]
    %v237 = vld [vmem:[#allocation5 + $0x1d0] sm:$0xf]
    %v238 = vld [vmem:[#allocation5 + $0x1d4] sm:$0xf]
    %v239 = vld [vmem:[#allocation5 + $0x1d8] sm:$0xf]
    %v240 = vld [vmem:[#allocation5 + $0x1dc] sm:$0xf]
    %v241 = vld [vmem:[#allocation5 + $0x1e0] sm:$0xf]
    %v242 = vld [vmem:[#allocation5 + $0x1e4] sm:$0xf]
    %v243 = vld [vmem:[#allocation5 + $0x1e8] sm:$0xf]
    %v244 = vld [vmem:[#allocation5 + $0x1ec] sm:$0xf]
    %v245 = vld [vmem:[#allocation5 + $0x1f0] sm:$0xf]
    %v246 = vld [vmem:[#allocation5 + $0x1f4] sm:$0xf]
    %v247 = vld [vmem:[#allocation5 + $0x1f8] sm:$0xf]
    %v248 = vld [vmem:[#allocation5 + $0x1fc] sm:$0xf]
    %v249 = vld [vmem:[%s3] sm:$0x1]
    %v251 = vlaneseq
    %v252 = vshrl.u32 %v251, 7
    %v253 = vsub.s32 0, %v252
    %v254 = vrot.slane %v249, %v253
    %v384 = vunpack.c.l.b16 %v121
    %v385 = vunpack.c.l.b16 %v122
    %v386 = vunpack.c.l.b16 %v123
    %v387 = vunpack.c.l.b16 %v124
    %v388 = vunpack.c.l.b16 %v125
    %v389 = vunpack.c.l.b16 %v126
    %v390 = vunpack.c.l.b16 %v127
    %v391 = vunpack.c.l.b16 %v128
    %v392 = vunpack.c.l.b16 %v129
    %v393 = vunpack.c.l.b16 %v130
    %v394 = vunpack.c.l.b16 %v131
    %v395 = vunpack.c.l.b16 %v132
    %v396 = vunpack.c.l.b16 %v133
    %v397 = vunpack.c.l.b16 %v134
    %v398 = vunpack.c.l.b16 %v135
    %v399 = vunpack.c.l.b16 %v136
    %v400 = vunpack.c.l.b16 %v137
    %v401 = vunpack.c.l.b16 %v138
    %v402 = vunpack.c.l.b16 %v139
    %v403 = vunpack.c.l.b16 %v140
    %v404 = vunpack.c.l.b16 %v141
    %v405 = vunpack.c.l.b16 %v142
    %v406 = vunpack.c.l.b16 %v143
    %v407 = vunpack.c.l.b16 %v144
    %v408 = vunpack.c.l.b16 %v145
    %v409 = vunpack.c.l.b16 %v146
    %v410 = vunpack.c.l.b16 %v147
    %v411 = vunpack.c.l.b16 %v148
    %v412 = vunpack.c.l.b16 %v149
    %v413 = vunpack.c.l.b16 %v150
    %v414 = vunpack.c.l.b16 %v151
    %v415 = vunpack.c.l.b16 %v152
    %v416 = vunpack.c.l.b16 %v153
    %v417 = vunpack.c.l.b16 %v154
    %v418 = vunpack.c.l.b16 %v155
    %v419 = vunpack.c.l.b16 %v156
    %v420 = vunpack.c.l.b16 %v157
    %v421 = vunpack.c.l.b16 %v158
    %v422 = vunpack.c.l.b16 %v159
    %v423 = vunpack.c.l.b16 %v160
    %v424 = vunpack.c.l.b16 %v161
    %v425 = vunpack.c.l.b16 %v162
    %v426 = vunpack.c.l.b16 %v163
    %v427 = vunpack.c.l.b16 %v164
    %v428 = vunpack.c.l.b16 %v165
    %v429 = vunpack.c.l.b16 %v166
    %v430 = vunpack.c.l.b16 %v167
    %v431 = vunpack.c.l.b16 %v168
    %v432 = vunpack.c.l.b16 %v169
    %v433 = vunpack.c.l.b16 %v170
    %v434 = vunpack.c.l.b16 %v171
    %v435 = vunpack.c.l.b16 %v172
    %v436 = vunpack.c.l.b16 %v173
    %v437 = vunpack.c.l.b16 %v174
    %v438 = vunpack.c.l.b16 %v175
    %v439 = vunpack.c.l.b16 %v176
    %v440 = vunpack.c.l.b16 %v177
    %v441 = vunpack.c.l.b16 %v178
    %v442 = vunpack.c.l.b16 %v179
    %v443 = vunpack.c.l.b16 %v180
    %v444 = vunpack.c.l.b16 %v181
    %v445 = vunpack.c.l.b16 %v182
    %v446 = vunpack.c.l.b16 %v183
    %v447 = vunpack.c.l.b16 %v184
    %v448 = vunpack.c.l.b16 %v185
    %v449 = vunpack.c.l.b16 %v186
    %v450 = vunpack.c.l.b16 %v187
    %v451 = vunpack.c.l.b16 %v188
    %v452 = vunpack.c.l.b16 %v189
    %v453 = vunpack.c.l.b16 %v190
    %v454 = vunpack.c.l.b16 %v191
    %v455 = vunpack.c.l.b16 %v192
    %v456 = vunpack.c.l.b16 %v193
    %v457 = vunpack.c.l.b16 %v194
    %v458 = vunpack.c.l.b16 %v195
    %v459 = vunpack.c.l.b16 %v196
    %v460 = vunpack.c.l.b16 %v197
    %v461 = vunpack.c.l.b16 %v198
    %v462 = vunpack.c.l.b16 %v199
    %v463 = vunpack.c.l.b16 %v200
    %v464 = vunpack.c.l.b16 %v201
    %v465 = vunpack.c.l.b16 %v202
    %v466 = vunpack.c.l.b16 %v203
    %v467 = vunpack.c.l.b16 %v204
    %v468 = vunpack.c.l.b16 %v205
    %v469 = vunpack.c.l.b16 %v206
    %v470 = vunpack.c.l.b16 %v207
    %v471 = vunpack.c.l.b16 %v208
    %v472 = vunpack.c.l.b16 %v209
    %v473 = vunpack.c.l.b16 %v210
    %v474 = vunpack.c.l.b16 %v211
    %v475 = vunpack.c.l.b16 %v212
    %v476 = vunpack.c.l.b16 %v213
    %v477 = vunpack.c.l.b16 %v214
    %v478 = vunpack.c.l.b16 %v215
    %v479 = vunpack.c.l.b16 %v216
    %v480 = vunpack.c.l.b16 %v217
    %v481 = vunpack.c.l.b16 %v218
    %v482 = vunpack.c.l.b16 %v219
    %v483 = vunpack.c.l.b16 %v220
    %v484 = vunpack.c.l.b16 %v221
    %v485 = vunpack.c.l.b16 %v222
    %v486 = vunpack.c.l.b16 %v223
    %v487 = vunpack.c.l.b16 %v224
    %v488 = vunpack.c.l.b16 %v225
    %v489 = vunpack.c.l.b16 %v226
    %v490 = vunpack.c.l.b16 %v227
    %v491 = vunpack.c.l.b16 %v228
    %v492 = vunpack.c.l.b16 %v229
    %v493 = vunpack.c.l.b16 %v230
    %v494 = vunpack.c.l.b16 %v231
    %v495 = vunpack.c.l.b16 %v232
    %v496 = vunpack.c.l.b16 %v233
    %v497 = vunpack.c.l.b16 %v234
    %v498 = vunpack.c.l.b16 %v235
    %v499 = vunpack.c.l.b16 %v236
    %v500 = vunpack.c.l.b16 %v237
    %v501 = vunpack.c.l.b16 %v238
    %v502 = vunpack.c.l.b16 %v239
    %v503 = vunpack.c.l.b16 %v240
    %v504 = vunpack.c.l.b16 %v241
    %v505 = vunpack.c.l.b16 %v242
    %v506 = vunpack.c.l.b16 %v243
    %v507 = vunpack.c.l.b16 %v244
    %v508 = vunpack.c.l.b16 %v245
    %v509 = vunpack.c.l.b16 %v246
    %v510 = vunpack.c.l.b16 %v247
    %v511 = vunpack.c.l.b16 %v248
    %v512 = vpack.c.b16 %v385, %v384
    %v513 = vpack.c.b16 %v387, %v386
    %v514 = vpack.c.b16 %v389, %v388
    %v515 = vpack.c.b16 %v391, %v390
    %v516 = vpack.c.b16 %v393, %v392
    %v517 = vpack.c.b16 %v395, %v394
    %v518 = vpack.c.b16 %v397, %v396
    %v519 = vpack.c.b16 %v399, %v398
    %v520 = vpack.c.b16 %v401, %v400
    %v521 = vpack.c.b16 %v403, %v402
    %v522 = vpack.c.b16 %v405, %v404
    %v523 = vpack.c.b16 %v407, %v406
    %v524 = vpack.c.b16 %v409, %v408
    %v525 = vpack.c.b16 %v411, %v410
    %v526 = vpack.c.b16 %v413, %v412
    %v527 = vpack.c.b16 %v415, %v414
    %v528 = vpack.c.b16 %v417, %v416
    %v529 = vpack.c.b16 %v419, %v418
    %v530 = vpack.c.b16 %v421, %v420
    %v531 = vpack.c.b16 %v423, %v422
    %v532 = vpack.c.b16 %v425, %v424
    %v533 = vpack.c.b16 %v427, %v426
    %v534 = vpack.c.b16 %v429, %v428
    %v535 = vpack.c.b16 %v431, %v430
    %v536 = vpack.c.b16 %v433, %v432
    %v537 = vpack.c.b16 %v435, %v434
    %v538 = vpack.c.b16 %v437, %v436
    %v539 = vpack.c.b16 %v439, %v438
    %v540 = vpack.c.b16 %v441, %v440
    %v541 = vpack.c.b16 %v443, %v442
    %v542 = vpack.c.b16 %v445, %v444
    %v543 = vpack.c.b16 %v447, %v446
    %v544 = vpack.c.b16 %v449, %v448
    %v545 = vpack.c.b16 %v451, %v450
    %v546 = vpack.c.b16 %v453, %v452
    %v547 = vpack.c.b16 %v455, %v454
    %v548 = vpack.c.b16 %v457, %v456
    %v549 = vpack.c.b16 %v459, %v458
    %v550 = vpack.c.b16 %v461, %v460
    %v551 = vpack.c.b16 %v463, %v462
    %v552 = vpack.c.b16 %v465, %v464
    %v553 = vpack.c.b16 %v467, %v466
    %v554 = vpack.c.b16 %v469, %v468
    %v555 = vpack.c.b16 %v471, %v470
    %v556 = vpack.c.b16 %v473, %v472
    %v557 = vpack.c.b16 %v475, %v474
    %v558 = vpack.c.b16 %v477, %v476
    %v559 = vpack.c.b16 %v479, %v478
    %v560 = vpack.c.b16 %v481, %v480
    %v561 = vpack.c.b16 %v483, %v482
    %v562 = vpack.c.b16 %v485, %v484
    %v563 = vpack.c.b16 %v487, %v486
    %v564 = vpack.c.b16 %v489, %v488
    %v565 = vpack.c.b16 %v491, %v490
    %v566 = vpack.c.b16 %v493, %v492
    %v567 = vpack.c.b16 %v495, %v494
    %v568 = vpack.c.b16 %v497, %v496
    %v569 = vpack.c.b16 %v499, %v498
    %v570 = vpack.c.b16 %v501, %v500
    %v571 = vpack.c.b16 %v503, %v502
    %v572 = vpack.c.b16 %v505, %v504
    %v573 = vpack.c.b16 %v507, %v506
    %v574 = vpack.c.b16 %v509, %v508
    %v575 = vpack.c.b16 %v511, %v510
    %640 = vmatprep.subr.bf16.mxu0 0
    %641 = vmatpush1.bf16.msra.mxu0 %v512
    %642 = vmatprep.subr.bf16.mxu0 0
    %643 = vmatpush1.bf16.msra.mxu0 %v513
    %644 = vmatprep.subr.bf16.mxu0 0
    %645 = vmatpush1.bf16.msra.mxu0 %v514
    %646 = vmatprep.subr.bf16.mxu0 0
    %647 = vmatpush1.bf16.msra.mxu0 %v515
    %648 = vmatprep.subr.bf16.mxu0 0
    %649 = vmatpush1.bf16.msra.mxu0 %v516
    %650 = vmatprep.subr.bf16.mxu0 0
    %651 = vmatpush1.bf16.msra.mxu0 %v517
    %652 = vmatprep.subr.bf16.mxu0 0
    %653 = vmatpush1.bf16.msra.mxu0 %v518
    %654 = vmatprep.subr.bf16.mxu0 0
    %655 = vmatpush1.bf16.msra.mxu0 %v519
    %656 = vmatprep.subr.bf16.mxu0 0
    %657 = vmatpush1.bf16.msra.mxu0 %v520
    %658 = vmatprep.subr.bf16.mxu0 0
    %659 = vmatpush1.bf16.msra.mxu0 %v521
    %660 = vmatprep.subr.bf16.mxu0 0
    %661 = vmatpush1.bf16.msra.mxu0 %v522
    %662 = vmatprep.subr.bf16.mxu0 0
    %663 = vmatpush1.bf16.msra.mxu0 %v523
    %664 = vmatprep.subr.bf16.mxu0 0
    %665 = vmatpush1.bf16.msra.mxu0 %v524
    %666 = vmatprep.subr.bf16.mxu0 0
    %667 = vmatpush1.bf16.msra.mxu0 %v525
    %668 = vmatprep.subr.bf16.mxu0 0
    %669 = vmatpush1.bf16.msra.mxu0 %v526
    %670 = vmatprep.subr.bf16.mxu0 0
    %671 = vmatpush1.bf16.msra.mxu0 %v527
    %672 = vmatprep.mubr.bf16.mxu0 %v114
    %673 = vmatmul.mubr.bf16.gmra.mrb[0].mxu0 %v113
    %v674 = vpop.f32.mrb[0].mxu0
    %v675 = vadd.f32 %v254, %v674
    %v676 = vpop.f32.mrb[0].mxu0
    %v677 = vpop.f32.mrb[0].mxu0
    %v678 = vpop.f32.mrb[0].mxu0
    %679 = vdwg.mxu0
    %680 = vmatprep.subr.bf16.mxu0 0
    %681 = vmatpush1.bf16.msra.mxu0 %v528
    %682 = vmatprep.subr.bf16.mxu0 0
    %683 = vmatpush1.bf16.msra.mxu0 %v529
    %684 = vmatprep.subr.bf16.mxu0 0
    %685 = vmatpush1.bf16.msra.mxu0 %v530
    %686 = vmatprep.subr.bf16.mxu0 0
    %687 = vmatpush1.bf16.msra.mxu0 %v531
    %688 = vmatprep.subr.bf16.mxu0 0
    %689 = vmatpush1.bf16.msra.mxu0 %v532
    %690 = vmatprep.subr.bf16.mxu0 0
    %691 = vmatpush1.bf16.msra.mxu0 %v533
    %692 = vmatprep.subr.bf16.mxu0 0
    %693 = vmatpush1.bf16.msra.mxu0 %v534
    %694 = vmatprep.subr.bf16.mxu0 0
    %695 = vmatpush1.bf16.msra.mxu0 %v535
    %696 = vmatprep.subr.bf16.mxu0 0
    %697 = vmatpush1.bf16.msra.mxu0 %v536
    %698 = vmatprep.subr.bf16.mxu0 0
    %699 = vmatpush1.bf16.msra.mxu0 %v537
    %700 = vmatprep.subr.bf16.mxu0 0
    %701 = vmatpush1.bf16.msra.mxu0 %v538
    %702 = vmatprep.subr.bf16.mxu0 0
    %703 = vmatpush1.bf16.msra.mxu0 %v539
    %704 = vmatprep.subr.bf16.mxu0 0
    %705 = vmatpush1.bf16.msra.mxu0 %v540
    %706 = vmatprep.subr.bf16.mxu0 0
    %707 = vmatpush1.bf16.msra.mxu0 %v541
    %708 = vmatprep.subr.bf16.mxu0 0
    %709 = vmatpush1.bf16.msra.mxu0 %v542
    %710 = vmatprep.subr.bf16.mxu0 0
    %711 = vmatpush1.bf16.msra.mxu0 %v543
    %712 = vmatprep.mubr.bf16.mxu0 %v116
    %713 = vmatmul.mubr.bf16.gmra.mrb[0].mxu0 %v115
    %v714 = vpop.f32.mrb[0].mxu0
    %v715 = vadd.f32 %v675, %v714
    %v716 = vpop.f32.mrb[0].mxu0
    %v717 = vpop.f32.mrb[0].mxu0
    %v718 = vpop.f32.mrb[0].mxu0
    %719 = vdwg.mxu0
    %720 = vmatprep.subr.bf16.mxu0 0
    %721 = vmatpush1.bf16.msra.mxu0 %v544
    %722 = vmatprep.subr.bf16.mxu0 0
    %723 = vmatpush1.bf16.msra.mxu0 %v545
    %724 = vmatprep.subr.bf16.mxu0 0
    %725 = vmatpush1.bf16.msra.mxu0 %v546
    %726 = vmatprep.subr.bf16.mxu0 0
    %727 = vmatpush1.bf16.msra.mxu0 %v547
    %728 = vmatprep.subr.bf16.mxu0 0
    %729 = vmatpush1.bf16.msra.mxu0 %v548
    %730 = vmatprep.subr.bf16.mxu0 0
    %731 = vmatpush1.bf16.msra.mxu0 %v549
    %732 = vmatprep.subr.bf16.mxu0 0
    %733 = vmatpush1.bf16.msra.mxu0 %v550
    %734 = vmatprep.subr.bf16.mxu0 0
    %735 = vmatpush1.bf16.msra.mxu0 %v551
    %736 = vmatprep.subr.bf16.mxu0 0
    %737 = vmatpush1.bf16.msra.mxu0 %v552
    %738 = vmatprep.subr.bf16.mxu0 0
    %739 = vmatpush1.bf16.msra.mxu0 %v553
    %740 = vmatprep.subr.bf16.mxu0 0
    %741 = vmatpush1.bf16.msra.mxu0 %v554
    %742 = vmatprep.subr.bf16.mxu0 0
    %743 = vmatpush1.bf16.msra.mxu0 %v555
    %744 = vmatprep.subr.bf16.mxu0 0
    %745 = vmatpush1.bf16.msra.mxu0 %v556
    %746 = vmatprep.subr.bf16.mxu0 0
    %747 = vmatpush1.bf16.msra.mxu0 %v557
    %748 = vmatprep.subr.bf16.mxu0 0
    %749 = vmatpush1.bf16.msra.mxu0 %v558
    %750 = vmatprep.subr.bf16.mxu0 0
    %751 = vmatpush1.bf16.msra.mxu0 %v559
    %752 = vmatprep.mubr.bf16.mxu0 %v118
    %753 = vmatmul.mubr.bf16.gmra.mrb[0].mxu0 %v117
    %v754 = vpop.f32.mrb[0].mxu0
    %v755 = vadd.f32 %v715, %v754
    %v756 = vpop.f32.mrb[0].mxu0
    %v757 = vpop.f32.mrb[0].mxu0
    %v758 = vpop.f32.mrb[0].mxu0
    %759 = vdwg.mxu0
    %760 = vmatprep.subr.bf16.mxu0 0
    %761 = vmatpush1.bf16.msra.mxu0 %v560
    %762 = vmatprep.subr.bf16.mxu0 0
    %763 = vmatpush1.bf16.msra.mxu0 %v561
    %764 = vmatprep.subr.bf16.mxu0 0
    %765 = vmatpush1.bf16.msra.mxu0 %v562
    %766 = vmatprep.subr.bf16.mxu0 0
    %767 = vmatpush1.bf16.msra.mxu0 %v563
    %768 = vmatprep.subr.bf16.mxu0 0
    %769 = vmatpush1.bf16.msra.mxu0 %v564
    %770 = vmatprep.subr.bf16.mxu0 0
    %771 = vmatpush1.bf16.msra.mxu0 %v565
    %772 = vmatprep.subr.bf16.mxu0 0
    %773 = vmatpush1.bf16.msra.mxu0 %v566
    %774 = vmatprep.subr.bf16.mxu0 0
    %775 = vmatpush1.bf16.msra.mxu0 %v567
    %776 = vmatprep.subr.bf16.mxu0 0
    %777 = vmatpush1.bf16.msra.mxu0 %v568
    %778 = vmatprep.subr.bf16.mxu0 0
    %779 = vmatpush1.bf16.msra.mxu0 %v569
    %780 = vmatprep.subr.bf16.mxu0 0
    %781 = vmatpush1.bf16.msra.mxu0 %v570
    %782 = vmatprep.subr.bf16.mxu0 0
    %783 = vmatpush1.bf16.msra.mxu0 %v571
    %784 = vmatprep.subr.bf16.mxu0 0
    %785 = vmatpush1.bf16.msra.mxu0 %v572
    %786 = vmatprep.subr.bf16.mxu0 0
    %787 = vmatpush1.bf16.msra.mxu0 %v573
    %788 = vmatprep.subr.bf16.mxu0 0
    %789 = vmatpush1.bf16.msra.mxu0 %v574
    %790 = vmatprep.subr.bf16.mxu0 0
    %791 = vmatpush1.bf16.msra.mxu0 %v575
    %792 = vmatprep.mubr.bf16.mxu0 %v120
    %793 = vmatmul.mubr.bf16.gmra.mrb[0].mxu0 %v119
    %v794 = vpop.f32.mrb[0].mxu0
    %v795 = vadd.f32 %v755, %v794
    %v796 = vpop.f32.mrb[0].mxu0
    %v797 = vpop.f32.mrb[0].mxu0
    %v798 = vpop.f32.mrb[0].mxu0
    %799 = vdwg.mxu0
    %v800 = vmul.f32 %v795, 0.5
    %v801 = vmul.f32 %v800, 1.442695
    %v802 = vpow.pop %v801
    %v803 = vld [vmem:[%s1] sm:$0x3]
    %805 = vrot.lane.b32.xlu0 %v803, 32
    %v806 = vpop.permute.xlu0 %805
    %v808 = vmul.f32 %v802, %v806
    %810 = vrot.lane.b32.xlu0 %v808, 96
    %v811 = vpop.permute.xlu0 %810
    %v813 = vadd.f32 %v795, %v811
    %v814 = vpack.c.bf16 %v813, %v813
    %v815 = vld [vmem:[#allocation7] sm:$0xff]
    %v816 = vld [vmem:[#allocation7 + $0x8] sm:$0xff]
    %v817 = vld [vmem:[#allocation7 + $0x10] sm:$0xff]
    %v818 = vld [vmem:[#allocation7 + $0x18] sm:$0xff]
    %v819 = vld [vmem:[#allocation7 + $0x20] sm:$0xff]
    %v820 = vld [vmem:[#allocation7 + $0x28] sm:$0xff]
    %v821 = vld [vmem:[#allocation7 + $0x30] sm:$0xff]
    %v822 = vld [vmem:[#allocation7 + $0x38] sm:$0xff]
    %v823 = vld [vmem:[#allocation7 + $0x40] sm:$0xff]
    %v824 = vld [vmem:[#allocation7 + $0x48] sm:$0xff]
    %v825 = vld [vmem:[#allocation7 + $0x50] sm:$0xff]
    %v826 = vld [vmem:[#allocation7 + $0x58] sm:$0xff]
    %v827 = vld [vmem:[#allocation7 + $0x60] sm:$0xff]
    %v828 = vld [vmem:[#allocation7 + $0x68] sm:$0xff]
    %v829 = vld [vmem:[#allocation7 + $0x70] sm:$0xff]
    %v830 = vld [vmem:[#allocation7 + $0x78] sm:$0xff]
    %v831 = vld [vmem:[%s5] sm:$0xff]
    %v833 = vlaneseq
    %v834 = vshrl.u32 %v833, 7
    %v835 = vsub.s32 0, %v834
    %v836 = vrot.slane %v831, %v835
    %v837 = vlaneseq
    %v838 = vshrl.u32 %v837, 7
    %v839 = vsub.s32 1, %v838
    %v840 = vrot.slane %v831, %v839
    %v841 = vlaneseq
    %v842 = vshrl.u32 %v841, 7
    %v843 = vsub.s32 2, %v842
    %v844 = vrot.slane %v831, %v843
    %v845 = vlaneseq
    %v846 = vshrl.u32 %v845, 7
    %v847 = vsub.s32 3, %v846
    %v848 = vrot.slane %v831, %v847
    %v849 = vlaneseq
    %v850 = vshrl.u32 %v849, 7
    %v851 = vsub.s32 4, %v850
    %v852 = vrot.slane %v831, %v851
    %v853 = vlaneseq
    %v854 = vshrl.u32 %v853, 7
    %v855 = vsub.s32 5, %v854
    %v856 = vrot.slane %v831, %v855
    %v857 = vlaneseq
    %v858 = vshrl.u32 %v857, 7
    %v859 = vsub.s32 6, %v858
    %v860 = vrot.slane %v831, %v859
    %v861 = vlaneseq
    %v862 = vshrl.u32 %v861, 7
    %v863 = vsub.s32 7, %v862
    %v864 = vrot.slane %v831, %v863
    %v889 = vunpack.c.l.b16 %v815
    %v890 = vunpack.c.h.b16 %v815
    %v891 = vunpack.c.l.b16 %v816
    %v892 = vunpack.c.h.b16 %v816
    %v893 = vunpack.c.l.b16 %v817
    %v894 = vunpack.c.h.b16 %v817
    %v895 = vunpack.c.l.b16 %v818
    %v896 = vunpack.c.h.b16 %v818
    %v897 = vunpack.c.l.b16 %v819
    %v898 = vunpack.c.h.b16 %v819
    %v899 = vunpack.c.l.b16 %v820
    %v900 = vunpack.c.h.b16 %v820
    %v901 = vunpack.c.l.b16 %v821
    %v902 = vunpack.c.h.b16 %v821
    %v903 = vunpack.c.l.b16 %v822
    %v904 = vunpack.c.h.b16 %v822
    %v905 = vunpack.c.l.b16 %v823
    %v906 = vunpack.c.h.b16 %v823
    %v907 = vunpack.c.l.b16 %v824
    %v908 = vunpack.c.h.b16 %v824
    %v909 = vunpack.c.l.b16 %v825
    %v910 = vunpack.c.h.b16 %v825
    %v911 = vunpack.c.l.b16 %v826
    %v912 = vunpack.c.h.b16 %v826
    %v913 = vunpack.c.l.b16 %v827
    %v914 = vunpack.c.h.b16 %v827
    %v915 = vunpack.c.l.b16 %v828
    %v916 = vunpack.c.h.b16 %v828
    %v917 = vunpack.c.l.b16 %v829
    %v918 = vunpack.c.h.b16 %v829
    %v919 = vunpack.c.l.b16 %v830
    %v920 = vunpack.c.h.b16 %v830
    %v921 = vpack.c.b16 %v897, %v889
    %v922 = vpack.c.b16 %v898, %v890
    %v923 = vpack.c.b16 %v899, %v891
    %v924 = vpack.c.b16 %v900, %v892
    %v925 = vpack.c.b16 %v901, %v893
    %v926 = vpack.c.b16 %v902, %v894
    %v927 = vpack.c.b16 %v903, %v895
    %v928 = vpack.c.b16 %v904, %v896
    %v929 = vpack.c.b16 %v913, %v905
    %v930 = vpack.c.b16 %v914, %v906
    %v931 = vpack.c.b16 %v915, %v907
    %v932 = vpack.c.b16 %v916, %v908
    %v933 = vpack.c.b16 %v917, %v909
    %v934 = vpack.c.b16 %v918, %v910
    %v935 = vpack.c.b16 %v919, %v911
    %v936 = vpack.c.b16 %v920, %v912
    %vm953 = vcmask 261120
    %v955 = vsel %vm953, %v814, 0
    %957 = vmatprep.subr.bf16.mxu0 %v922
    %958 = vmatpush1.bf16.msra.mxu0 %v921
    %959 = vmatprep.subr.bf16.mxu0 %v930
    %960 = vmatpush1.bf16.msra.mxu0 %v929
    %961 = vmatprep.subr.bf16.mxu0 0
    %962 = vmatpush1.bf16.msra.mxu0 0
    %963 = vmatprep.subr.bf16.mxu0 0
    %964 = vmatpush1.bf16.msra.mxu0 0
    %965 = vmatprep.subr.bf16.mxu0 0
    %966 = vmatpush1.bf16.msra.mxu0 0
    %967 = vmatprep.subr.bf16.mxu0 0
    %968 = vmatpush1.bf16.msra.mxu0 0
    %969 = vmatprep.subr.bf16.mxu0 0
    %970 = vmatpush1.bf16.msra.mxu0 0
    %971 = vmatprep.subr.bf16.mxu0 0
    %972 = vmatpush1.bf16.msra.mxu0 0
    %973 = vmatprep.subr.bf16.mxu0 0
    %974 = vmatpush1.bf16.msra.mxu0 0
    %975 = vmatprep.subr.bf16.mxu0 0
    %976 = vmatpush1.bf16.msra.mxu0 0
    %977 = vmatprep.subr.bf16.mxu0 0
    %978 = vmatpush1.bf16.msra.mxu0 0
    %979 = vmatprep.subr.bf16.mxu0 0
    %980 = vmatpush1.bf16.msra.mxu0 0
    %981 = vmatprep.subr.bf16.mxu0 0
    %982 = vmatpush1.bf16.msra.mxu0 0
    %983 = vmatprep.subr.bf16.mxu0 0
    %984 = vmatpush1.bf16.msra.mxu0 0
    %985 = vmatprep.subr.bf16.mxu0 0
    %986 = vmatpush1.bf16.msra.mxu0 0
    %987 = vmatprep.subr.bf16.mxu0 0
    %988 = vmatpush1.bf16.msra.mxu0 0
    %989 = vmatprep.mubr.bf16.mxu0 0
    %990 = vmatmul.mubr.bf16.gmra.mrb[0].mxu0 %v955
    %v991 = vpop.f32.mrb[0].mxu0
    %v992 = vadd.f32 %v836, %v991
    %v993 = vpop.f32.mrb[0].mxu0
    %v994 = vadd.f32 %v840, %v993
    %v995 = vpop.f32.mrb[0].mxu0
    %v996 = vpop.f32.mrb[0].mxu0
    %997 = vdwg.mxu0
    %998 = vmatprep.subr.bf16.mxu0 %v924
    %999 = vmatpush1.bf16.msra.mxu0 %v923
    %1000 = vmatprep.subr.bf16.mxu0 %v932
    %1001 = vmatpush1.bf16.msra.mxu0 %v931
    %1002 = vmatprep.subr.bf16.mxu0 0
    %1003 = vmatpush1.bf16.msra.mxu0 0
    %1004 = vmatprep.subr.bf16.mxu0 0
    %1005 = vmatpush1.bf16.msra.mxu0 0
    %1006 = vmatprep.subr.bf16.mxu0 0
    %1007 = vmatpush1.bf16.msra.mxu0 0
    %1008 = vmatprep.subr.bf16.mxu0 0
    %1009 = vmatpush1.bf16.msra.mxu0 0
    %1010 = vmatprep.subr.bf16.mxu0 0
    %1011 = vmatpush1.bf16.msra.mxu0 0
    %1012 = vmatprep.subr.bf16.mxu0 0
    %1013 = vmatpush1.bf16.msra.mxu0 0
    %1014 = vmatprep.subr.bf16.mxu0 0
    %1015 = vmatpush1.bf16.msra.mxu0 0
    %1016 = vmatprep.subr.bf16.mxu0 0
    %1017 = vmatpush1.bf16.msra.mxu0 0
    %1018 = vmatprep.subr.bf16.mxu0 0
    %1019 = vmatpush1.bf16.msra.mxu0 0
    %1020 = vmatprep.subr.bf16.mxu0 0
    %1021 = vmatpush1.bf16.msra.mxu0 0
    %1022 = vmatprep.subr.bf16.mxu0 0
    %1023 = vmatpush1.bf16.msra.mxu0 0
    %1024 = vmatprep.subr.bf16.mxu0 0
    %1025 = vmatpush1.bf16.msra.mxu0 0
    %1026 = vmatprep.subr.bf16.mxu0 0
    %1027 = vmatpush1.bf16.msra.mxu0 0
    %1028 = vmatprep.subr.bf16.mxu0 0
    %1029 = vmatpush1.bf16.msra.mxu0 0
    %1030 = vmatprep.mubr.bf16.mxu0 0
    %1031 = vmatmul.mubr.bf16.gmra.mrb[0].mxu0 %v955
    %v1032 = vpop.f32.mrb[0].mxu0
    %v1033 = vadd.f32 %v844, %v1032
    %v1034 = vpop.f32.mrb[0].mxu0
    %v1035 = vadd.f32 %v848, %v1034
    %v1036 = vpop.f32.mrb[0].mxu0
    %v1037 = vpop.f32.mrb[0].mxu0
    %1038 = vdwg.mxu0
    %1039 = vmatprep.subr.bf16.mxu0 %v926
    %1040 = vmatpush1.bf16.msra.mxu0 %v925
    %1041 = vmatprep.subr.bf16.mxu0 %v934
    %1042 = vmatpush1.bf16.msra.mxu0 %v933
    %1043 = vmatprep.subr.bf16.mxu0 0
    %1044 = vmatpush1.bf16.msra.mxu0 0
    %1045 = vmatprep.subr.bf16.mxu0 0
    %1046 = vmatpush1.bf16.msra.mxu0 0
    %1047 = vmatprep.subr.bf16.mxu0 0
    %1048 = vmatpush1.bf16.msra.mxu0 0
    %1049 = vmatprep.subr.bf16.mxu0 0
    %1050 = vmatpush1.bf16.msra.mxu0 0
    %1051 = vmatprep.subr.bf16.mxu0 0
    %1052 = vmatpush1.bf16.msra.mxu0 0
    %1053 = vmatprep.subr.bf16.mxu0 0
    %1054 = vmatpush1.bf16.msra.mxu0 0
    %1055 = vmatprep.subr.bf16.mxu0 0
    %1056 = vmatpush1.bf16.msra.mxu0 0
    %1057 = vmatprep.subr.bf16.mxu0 0
    %1058 = vmatpush1.bf16.msra.mxu0 0
    %1059 = vmatprep.subr.bf16.mxu0 0
    %1060 = vmatpush1.bf16.msra.mxu0 0
    %1061 = vmatprep.subr.bf16.mxu0 0
    %1062 = vmatpush1.bf16.msra.mxu0 0
    %1063 = vmatprep.subr.bf16.mxu0 0
    %1064 = vmatpush1.bf16.msra.mxu0 0
    %1065 = vmatprep.subr.bf16.mxu0 0
    %1066 = vmatpush1.bf16.msra.mxu0 0
    %1067 = vmatprep.subr.bf16.mxu0 0
    %1068 = vmatpush1.bf16.msra.mxu0 0
    %1069 = vmatprep.subr.bf16.mxu0 0
    %1070 = vmatpush1.bf16.msra.mxu0 0
    %1071 = vmatprep.mubr.bf16.mxu0 0
    %1072 = vmatmul.mubr.bf16.gmra.mrb[0].mxu0 %v955
    %v1073 = vpop.f32.mrb[0].mxu0
    %v1074 = vadd.f32 %v852, %v1073
    %v1075 = vpop.f32.mrb[0].mxu0
    %v1076 = vadd.f32 %v856, %v1075
    %v1077 = vpop.f32.mrb[0].mxu0
    %v1078 = vpop.f32.mrb[0].mxu0
    %1079 = vdwg.mxu0
    %1080 = vmatprep.subr.bf16.mxu0 %v928
    %1081 = vmatpush1.bf16.msra.mxu0 %v927
    %1082 = vmatprep.subr.bf16.mxu0 %v936
    %1083 = vmatpush1.bf16.msra.mxu0 %v935
    %1084 = vmatprep.subr.bf16.mxu0 0
    %1085 = vmatpush1.bf16.msra.mxu0 0
    %1086 = vmatprep.subr.bf16.mxu0 0
    %1087 = vmatpush1.bf16.msra.mxu0 0
    %1088 = vmatprep.subr.bf16.mxu0 0
    %1089 = vmatpush1.bf16.msra.mxu0 0
    %1090 = vmatprep.subr.bf16.mxu0 0
    %1091 = vmatpush1.bf16.msra.mxu0 0
    %1092 = vmatprep.subr.bf16.mxu0 0
    %1093 = vmatpush1.bf16.msra.mxu0 0
    %1094 = vmatprep.subr.bf16.mxu0 0
    %1095 = vmatpush1.bf16.msra.mxu0 0
    %1096 = vmatprep.subr.bf16.mxu0 0
    %1097 = vmatpush1.bf16.msra.mxu0 0
    %1098 = vmatprep.subr.bf16.mxu0 0
    %1099 = vmatpush1.bf16.msra.mxu0 0
    %1100 = vmatprep.subr.bf16.mxu0 0
    %1101 = vmatpush1.bf16.msra.mxu0 0
    %1102 = vmatprep.subr.bf16.mxu0 0
    %1103 = vmatpush1.bf16.msra.mxu0 0
    %1104 = vmatprep.subr.bf16.mxu0 0
    %1105 = vmatpush1.bf16.msra.mxu0 0
    %1106 = vmatprep.subr.bf16.mxu0 0
    %1107 = vmatpush1.bf16.msra.mxu0 0
    %1108 = vmatprep.subr.bf16.mxu0 0
    %1109 = vmatpush1.bf16.msra.mxu0 0
    %1110 = vmatprep.subr.bf16.mxu0 0
    %1111 = vmatpush1.bf16.msra.mxu0 0
    %1112 = vmatprep.mubr.bf16.mxu0 0
    %1113 = vmatmul.mubr.bf16.gmra.mrb[0].mxu0 %v955
    %v1114 = vpop.f32.mrb[0].mxu0
    %v1115 = vadd.f32 %v860, %v1114
    %v1116 = vpop.f32.mrb[0].mxu0
    %v1117 = vadd.f32 %v864, %v1116
    %v1118 = vpop.f32.mrb[0].mxu0
    %v1119 = vpop.f32.mrb[0].mxu0
    %1120 = vdwg.mxu0
    %v1121 = vpack.c.bf16 %v992, %v992
    %v1122 = vpack.c.bf16 %v994, %v994
    %v1123 = vpack.c.bf16 %v1033, %v1033
    %v1124 = vpack.c.bf16 %v1035, %v1035
    %v1125 = vpack.c.bf16 %v1074, %v1074
    %v1126 = vpack.c.bf16 %v1076, %v1076
    %v1127 = vpack.c.bf16 %v1115, %v1115
    %v1128 = vpack.c.bf16 %v1117, %v1117
    %v1137 = vcombine.low %v1121, %v1122
    %v1138 = vcombine.low %v1123, %v1124
    %v1139 = vcombine.low %v1125, %v1126
    %v1140 = vcombine.low %v1127, %v1128
    %v1142 = vunpack.c.l.s4 1966171168
    %v1143 = vunpack.c.0.s8 %v1142
    %v1144 = vlaneseq
    %v1145 = vshrl.u32 %v1144, 7
    %v1146 = vsub.s32 %v1143, %v1145
    %v1147 = vrot.slane %v1137, %v1146
    %v1149 = vunpack.c.l.s4 1966171168
    %v1150 = vunpack.c.0.s8 %v1149
    %v1151 = vlaneseq
    %v1152 = vshrl.u32 %v1151, 7
    %v1153 = vsub.s32 %v1150, %v1152
    %v1154 = vrot.slane %v1138, %v1153
    %v1156 = vunpack.c.l.s4 1966171168
    %v1157 = vunpack.c.0.s8 %v1156
    %v1158 = vlaneseq
    %v1159 = vshrl.u32 %v1158, 7
    %v1160 = vsub.s32 %v1157, %v1159
    %v1161 = vrot.slane %v1139, %v1160
    %v1163 = vunpack.c.l.s4 1966171168
    %v1164 = vunpack.c.0.s8 %v1163
    %v1165 = vlaneseq
    %v1166 = vshrl.u32 %v1165, 7
    %v1167 = vsub.s32 %v1164, %v1166
    %v1168 = vrot.slane %v1140, %v1167
    %v1169 = vcombine.low %v1147, %v1154
    %v1170 = vcombine.low %v1161, %v1168
    %v1172 = vunpack.c.l.s4 1966171168
    %v1173 = vunpack.c.0.s8 %v1172
    %v1174 = vlaneseq
    %v1175 = vshrl.u32 %v1174, 7
    %v1176 = vsub.s32 %v1173, %v1175
    %v1177 = vrot.slane %v1169, %v1176
    %v1179 = vunpack.c.l.s4 1966171168
    %v1180 = vunpack.c.0.s8 %v1179
    %v1181 = vlaneseq
    %v1182 = vshrl.u32 %v1181, 7
    %v1183 = vsub.s32 %v1180, %v1182
    %v1184 = vrot.slane %v1170, %v1183
    %v1185 = vcombine.low %v1177, %v1184
    %1187 = vst [vmem:[#allocation8] sm:$0xff] %v1185
    %v1188 = vsub.f32 %v992, %v78
    %v1189 = vsub.f32 %v994, %v86
    %v1190 = vsub.f32 %v1033, %v85
    %v1191 = vsub.f32 %v1035, %v87
    %v1192 = vsub.f32 %v1074, %v95
    %v1193 = vsub.f32 %v1076, %v103
    %v1194 = vsub.f32 %v1115, %v102
    %v1195 = vsub.f32 %v1117, %v104
    %v1196 = vmul.f32 %v1188, %v1188
    %v1197 = vmul.f32 %v1189, %v1189
    %v1198 = vmul.f32 %v1190, %v1190
    %v1199 = vmul.f32 %v1191, %v1191
    %v1200 = vmul.f32 %v1192, %v1192
    %v1201 = vmul.f32 %v1193, %v1193
    %v1202 = vmul.f32 %v1194, %v1194
    %v1203 = vmul.f32 %v1195, %v1195
    %v1204 = vmul.f32 %v802, %v802
    %v1205 = vadd.f32 %v795, 1.0
    %v1206 = vmul.f32 %v795, %v795
    %1208 = vrot.lane.b32.xlu0 %v1206, 32
    %v1209 = vpop.permute.xlu0 %1208
    %v1211 = vsub.f32 %v1205, %v1209
    %v1212 = vsub.f32 %v1211, %v1204
    %vm1213 = vcmask 1041408
    %v1214 = vsel %vm1213, %v1196, 0.0
    %v1215 = vsel %vm1213, %v1197, 0.0
    %v1216 = vadd.f32 %v1214, %v1215
    %v1217 = vsel %vm1213, %v1198, 0.0
    %v1218 = vadd.f32 %v1216, %v1217
    %v1219 = vsel %vm1213, %v1199, 0.0
    %v1220 = vadd.f32 %v1218, %v1219
    %v1221 = vsel %vm1213, %v1200, 0.0
    %v1222 = vadd.f32 %v1220, %v1221
    %v1223 = vsel %vm1213, %v1201, 0.0
    %v1224 = vadd.f32 %v1222, %v1223
    %v1225 = vsel %vm1213, %v1202, 0.0
    %v1226 = vadd.f32 %v1224, %v1225
    %v1227 = vsel %vm1213, %v1203, 0.0
    %v1228 = vadd.f32 %v1226, %v1227
    %1229 = vadd.xlane.f32.xlu0 %v1228
    %v1230 = vpop.xlane.xlu0 %1229
    %v1231 = vrot.slane %v1230, 4
    %v1232 = vadd.f32 %v1230, %v1231
    %v1233 = vrot.slane %v1232, 2
    %v1234 = vadd.f32 %v1232, %v1233
    %v1235 = vrot.slane %v1234, 1
    %v1236 = vadd.f32 %v1234, %v1235
    %s1237 = vtos %v1236
    %1239 = vrot.lane.b32.xlu0 %v1212, 96
    %v1240 = vpop.permute.xlu0 %1239
    %vm1242 = vcmask 254976
    %v1243 = vsel %vm1242, %v1240, 0.0
    %1244 = vadd.xlane.f32.xlu0 %v1243
    %v1245 = vpop.xlane.xlu0 %1244
    %v1246 = vrot.slane %v1245, 4
    %v1247 = vadd.f32 %v1245, %v1246
    %v1248 = vrot.slane %v1247, 2
    %v1249 = vadd.f32 %v1247, %v1248
    %v1250 = vrot.slane %v1249, 1
    %v1251 = vadd.f32 %v1249, %v1250
    %s1252 = vtos %v1251
    %s1253 = smul.f32 %s1252, -0.5
    %v1254 = vlaneseq
    %v1255 = vshrl.u32 %v1254, 7
    %v1256 = vlaneseq
    %v1257 = vand.u32 %v1256, 127
    %vm1258 = vcmp.eq.s32.totalorder %v1255, 0
    %vm1259 = vcmp.eq.s32.totalorder %v1257, 0
    %vm1260 = vmand %vm1258, %vm1259
    %vm1261 = vcmp.eq.s32.totalorder %v1257, 1
    %vm1262 = vmand %vm1258, %vm1261
    %v1263 = vstv %s1253
    %v1264 = vsel %vm1262, %v1263, 0.0
    %v1265 = vstv %s1237
    %v1266 = vsel %vm1260, %v1265, %v1264
    %1267 = vst [vmem:[#allocation9] sm:$0xff] %v1266
    // Predicated region
    $region38: #{tpu_custom_call.1} parent=1 // pred_check
      _
    $region39: #{tpu_custom_call.1} parent=1 // pred_check_branch
      %1269 = sbr.rel (0) target = $region41
    $region40: #{tpu_custom_call.1} parent=1 // pred_region
      %s1271 = ssub.s32 128, 128
      %1272 = vsyncadd [#allocation4], %s1271
      %s1274 = sshll.u32 [#allocation8], 4
      %s1275 = int_to_ptr.vmem [resolvable:$true] %s1274
      %1277 = dma.vmem_to_hbm [thread:$0]  %s1275, 128, %s6, [#allocation4]
    $region41: #{tpu_custom_call.1} parent=1 // pred_fallthru
      _
    // Predicated region
    $region42: #{tpu_custom_call.1} parent=1 // pred_check
      _
    $region43: #{tpu_custom_call.1} parent=1 // pred_check_branch
      %1279 = sbr.rel (0) target = $region45
    $region44: #{tpu_custom_call.1} parent=1 // pred_region
      %s1281 = ssub.s32 128, 128
      %1282 = vsyncadd [#allocation10], %s1281
      %s1284 = sshll.u32 [#allocation9], 4
      %s1285 = int_to_ptr.vmem [resolvable:$true] %s1284
      %1287 = dma.vmem_to_hbm [thread:$0]  %s1285, 128, %s7, [#allocation10]
    $region45: #{tpu_custom_call.1} parent=1 // pred_fallthru
      _
    // Predicated region
    $region46: #{tpu_custom_call.1} parent=1 // pred_check
      _
    $region47: #{tpu_custom_call.1} parent=1 // pred_check_branch
      %1289 = sbr.rel (0) target = $region49
    $region48: #{tpu_custom_call.1} parent=1 // pred_region
      %1290 = dma.done [#allocation4], 128
    $region49: #{tpu_custom_call.1} parent=1 // pred_fallthru
      _
    // Predicated region
    $region50: #{tpu_custom_call.1} parent=1 // pred_check
      _
    $region51: #{tpu_custom_call.1} parent=1 // pred_check_branch
      %1292 = sbr.rel (0) target = $region53
    $region52: #{tpu_custom_call.1} parent=1 // pred_region
      %1293 = dma.done [#allocation10], 128
    $region53: #{tpu_custom_call.1} parent=1 // pred_fallthru
      _
    %1294 = vsyncpa [#allocation3], 1
    %1295 = vsyncpa [#allocation6], 1
    %1296 = vsyncpa [#allocation4], 1
    %1297 = vsyncpa [#allocation10], 1

</llo_original>
